<compile_context>
chip_gen: v5e
topology: v5e:2x2
jax: 0.10.0
libtpu: 0.0.40
codegen_flags: <defaults>
</compile_context>

<pallas_src>
import math
import functools

import jax
import jax.numpy as jnp
from jax.experimental import pallas as pl
from jax.experimental.pallas import tpu as pltpu


def _recip(x):
    """Fast reciprocal: EUP vrcp + one Newton-Raphson step (~f32 accuracy)."""
    y = pl.reciprocal(x, approx=True)
    return y * (2.0 - x * y)


def _cluster_assignment_kernel(x_ref, ct_ref, csq_ref, o_ref, *,
                               alpha: float, power: float):
    # x_ref: [TN, D]   ct_ref: [D, K]   csq_ref: [1, K]   o_ref: [TN, K]
    x = x_ref[...]          # native dtype (f32 or bf16) straight to the MXU
    ct = ct_ref[...]

    # -2 x.c^T on the MXU, f32 accumulation.
    xc = jnp.dot(x, ct, preferred_element_type=jnp.float32)           # [TN, K]

    xf = x.astype(jnp.float32)
    x_sq = jnp.sum(xf * xf, axis=1, keepdims=True)                    # [TN, 1]
    c_sq = csq_ref[...]                                               # [1, K] f32

    norm_squared = x_sq + c_sq - 2.0 * xc                             # [TN, K]
    # Guard against tiny negatives from catastrophic cancellation.
    norm_squared = jnp.maximum(norm_squared, 0.0)

    # Student's t-kernel: (1 + ||x-c||^2 / alpha) ** (-(alpha+1)/2)
    base = 1.0 + norm_squared * (1.0 / alpha)

    if power == 1.0:                          # default alpha = 1.0
        numerator = _recip(base)
    elif power == 0.5:
        numerator = jax.lax.rsqrt(base)
    elif power == float(int(power)) and 1.0 < power <= 4.0:
        r = _recip(base)
        numerator = r
        for _ in range(int(power) - 1):
            numerator = numerator * r
    else:
        numerator = base ** (-power)          # single fused pow on the EUP

    denom = jnp.sum(numerator, axis=1, keepdims=True)                 # [TN, 1]
    o_ref[...] = (numerator * _recip(denom)).astype(o_ref.dtype)


def _pick_tile_n(N: int, D: int, K: int, itemsize: int) -> int:
    # Sublane quantum for the second-to-last dim (f32: 8, bf16: 16, 8-bit: 32).
    sub = 8 * max(1, 4 // itemsize)
    # Conservative VMEM budget (fits v5e's 16 MiB scoped default and v7x's
    # 64 MiB physical with plenty of headroom), accounting for double-buffered
    # x tile + out tile.
    vmem_budget = 8 * 1024 * 1024
    per_row = 2 * (D * itemsize + K * 4)
    tile_n = vmem_budget // max(per_row, 1)
    tile_n = min(tile_n, 1024)
    # Keep the grid >= 2 steps so both TensorCores on v7x get work and the
    # pipeline has something to overlap.
    tile_n = min(tile_n, pl.cdiv(N, 2))
    tile_n = max(sub, (tile_n // sub) * sub)
    return tile_n


def cluster_assignment(batch: jax.Array, cluster_centers: jax.Array,
                       alpha: float = 1.0, *, tile_n: int | None = None) -> jax.Array:
    """Soft cluster assignment: batch [N, D], centers [K, D] -> [N, K] (f32)."""
    N, D = batch.shape
    K, D2 = cluster_centers.shape
    assert D == D2, "embedding dimension mismatch"

    itemsize = jnp.dtype(batch.dtype).itemsize
    if tile_n is None:
        tile_n = _pick_tile_n(N, D, K, itemsize)
    sub = 8 * max(1, 4 // itemsize)
    assert tile_n % sub == 0, f"tile_n must be a multiple of {sub}"

    grid_n = pl.cdiv(N, tile_n)
    n_pad = grid_n * tile_n
    x = batch
    if n_pad != N:
        # Pad ragged N; padded rows produce harmless finite garbage, sliced off.
        x = jnp.pad(batch, ((0, n_pad - N), (0, 0)))

    # Hoisted, grid-invariant pieces: centers^T for the MXU and ||c||^2.
    c_t = jnp.transpose(cluster_centers)                               # [D, K]
    c32 = cluster_centers.astype(jnp.float32)
    c_sq = jnp.sum(c32 * c32, axis=1)[None, :]                         # [1, K] f32

    power = float(alpha + 1.0) / 2.0
    kernel = functools.partial(_cluster_assignment_kernel,
                               alpha=float(alpha), power=power)

    out = pl.pallas_call(
        kernel,
        out_shape=jax.ShapeDtypeStruct((n_pad, K), jnp.float32),
        grid_spec=pltpu.PrefetchScalarGridSpec(
            num_scalar_prefetch=0,
            grid=(grid_n,),
            in_specs=[
                pl.BlockSpec((tile_n, D), lambda i: (i, 0)),   # batch tile
                pl.BlockSpec((D, K), lambda i: (0, 0)),        # centers^T, resident
                pl.BlockSpec((1, K), lambda i: (0, 0)),        # ||c||^2, resident
            ],
            out_specs=pl.BlockSpec((tile_n, K), lambda i: (i, 0)),
        ),
        compiler_params=pltpu.CompilerParams(
            dimension_semantics=("parallel",),
        ),
    )(x, c_t, c_sq)

    if n_pad != N:
        out = out[:N]
    return out


def xavier_uniform(key, shape, dtype=jnp.float32):
    """Matches torch.nn.init.xavier_uniform_ for a 2-D [fan_out, fan_in] tensor."""
    fan_out, fan_in = shape
    bound = math.sqrt(6.0 / (fan_in + fan_out))
    return jax.random.uniform(key, shape, dtype=dtype, minval=-bound, maxval=bound)


def reference(batch, centers, alpha=1.0):
    # Pure-JAX mirror of the PyTorch forward (broadcast-subtract form).
    norm_squared = jnp.sum((batch[:, None, :] - centers[None, :, :]) ** 2, axis=2)
    numerator = 1.0 / (1.0 + norm_squared / alpha)
    power = float(alpha + 1.0) / 2.0
    numerator = numerator ** power
    return numerator / jnp.sum(numerator, axis=1, keepdims=True)


if __name__ == "__main__":
    cluster_number = 8
    embedding_dimension = 32
    batch_size = 128
    alpha = 1.0

    key = jax.random.PRNGKey(0)
    k_centers, k_batch = jax.random.split(key)

    cluster_centers = xavier_uniform(k_centers, (cluster_number, embedding_dimension))
    batch = jax.random.normal(k_batch, (batch_size, embedding_dimension),
                              dtype=jnp.float32)

    out = cluster_assignment(batch, cluster_centers, alpha=alpha)
    out = jax.block_until_ready(out)

    ref = reference(batch, cluster_centers, alpha=alpha)
    assert out.shape == (batch_size, cluster_number)
    assert jnp.allclose(out, ref, atol=1e-5, rtol=1e-5), "mismatch vs reference"
    # rows sum to 1
    assert jnp.allclose(jnp.sum(out, axis=1), 1.0, atol=1e-5)

    # Also exercise a ragged N that needs padding + a different alpha path.
    batch2 = jax.random.normal(jax.random.PRNGKey(1), (100, embedding_dimension),
                               dtype=jnp.float32)
    out2 = jax.block_until_ready(cluster_assignment(batch2, cluster_centers, alpha=3.0))
    ref2 = reference(batch2, cluster_centers, alpha=3.0)
    assert out2.shape == (100, cluster_number)
    assert jnp.allclose(out2, ref2, atol=1e-5, rtol=1e-5), "mismatch vs reference (alpha=3)"

    print("KERNEL_OK")
</pallas_src>

<mosaic_0001>
module attributes {stable_mosaic.version = 11 : i64} {
  func.func @_cluster_assignment_kernel(%arg0: i32, %arg1: memref<64x32xf32, #tpu.memory_space<vmem>>, %arg2: memref<32x8xf32, #tpu.memory_space<vmem>>, %arg3: memref<1x8xf32, #tpu.memory_space<vmem>>, %arg4: memref<64x8xf32, #tpu.memory_space<vmem>>) attributes {dimension_semantics = [#tpu.dimension_semantics<parallel>], iteration_bounds = array<i64: 2>, scalar_prefetch = 0 : i64, scratch_operands = 0 : i64, tpu.core_type = #tpu.core_type<tc>, window_params = [{transform_indices = @transform_0, window_bounds = array<i64: 64, 32>}, {pipeline_mode = #tpu.pipeline_mode<synchronous>, transform_indices = @transform_1, window_bounds = array<i64: 32, 8>}, {pipeline_mode = #tpu.pipeline_mode<synchronous>, transform_indices = @transform_2, window_bounds = array<i64: 1, 8>}, {transform_indices = @transform_3, window_bounds = array<i64: 64, 8>}]} {
    %c0 = arith.constant 0 : index
    %c0_0 = arith.constant 0 : index
    %0 = vector.load %arg1[%c0, %c0_0] : memref<64x32xf32, #tpu.memory_space<vmem>>, vector<64x32xf32>
    %c0_1 = arith.constant 0 : index
    %c0_2 = arith.constant 0 : index
    %1 = vector.load %arg2[%c0_1, %c0_2] : memref<32x8xf32, #tpu.memory_space<vmem>>, vector<32x8xf32>
    %cst = arith.constant dense<0.000000e+00> : vector<64x8xf32>
    %2 = tpu.matmul %0, %1, %cst {dimension_numbers = #tpu.dot_dimension_numbers<[1], [0], [0], [1], [0, 0, 1, 1], [], []>} : vector<64x32xf32>, vector<32x8xf32>, vector<64x8xf32> -> vector<64x8xf32>
    %3 = arith.mulf %0, %0 : vector<64x32xf32>
    %cst_3 = arith.constant dense<0.000000e+00> : vector<64xf32>
    %4 = vector.multi_reduction <add>, %3, %cst_3 [1] : vector<64x32xf32> to vector<64xf32>
    %5 = vector.shape_cast %4 : vector<64xf32> to vector<64x1xf32>
    %c0_4 = arith.constant 0 : index
    %c0_5 = arith.constant 0 : index
    %6 = vector.load %arg3[%c0_4, %c0_5] : memref<1x8xf32, #tpu.memory_space<vmem>>, vector<1x8xf32>
    %7 = vector.broadcast %5 : vector<64x1xf32> to vector<64x8xf32>
    %8 = vector.broadcast %6 : vector<1x8xf32> to vector<64x8xf32>
    %9 = arith.addf %7, %8 : vector<64x8xf32>
    %cst_6 = arith.constant 2.000000e+00 : f32
    %10 = vector.broadcast %cst_6 : f32 to vector<64x8xf32>
    %11 = arith.mulf %10, %2 : vector<64x8xf32>
    %12 = arith.subf %9, %11 : vector<64x8xf32>
    %cst_7 = arith.constant 0.000000e+00 : f32
    %13 = vector.broadcast %cst_7 : f32 to vector<64x8xf32>
    %14 = arith.maximumf %12, %13 : vector<64x8xf32>
    %cst_8 = arith.constant 1.000000e+00 : f32
    %15 = vector.broadcast %cst_8 : f32 to vector<64x8xf32>
    %16 = arith.mulf %14, %15 : vector<64x8xf32>
    %cst_9 = arith.constant 1.000000e+00 : f32
    %17 = vector.broadcast %cst_9 : f32 to vector<64x8xf32>
    %18 = arith.addf %17, %16 : vector<64x8xf32>
    %19 = tpu.reciprocal %18 {approx = true} : vector<64x8xf32> -> vector<64x8xf32>
    %20 = arith.mulf %18, %19 : vector<64x8xf32>
    %cst_10 = arith.constant 2.000000e+00 : f32
    %21 = vector.broadcast %cst_10 : f32 to vector<64x8xf32>
    %22 = arith.subf %21, %20 : vector<64x8xf32>
    %23 = arith.mulf %19, %22 : vector<64x8xf32>
    %cst_11 = arith.constant dense<0.000000e+00> : vector<64xf32>
    %24 = vector.multi_reduction <add>, %23, %cst_11 [1] : vector<64x8xf32> to vector<64xf32>
    %25 = vector.shape_cast %24 : vector<64xf32> to vector<64x1xf32>
    %26 = tpu.reciprocal %25 {approx = true} : vector<64x1xf32> -> vector<64x1xf32>
    %27 = arith.mulf %25, %26 : vector<64x1xf32>
    %cst_12 = arith.constant 2.000000e+00 : f32
    %28 = vector.broadcast %cst_12 : f32 to vector<64x1xf32>
    %29 = arith.subf %28, %27 : vector<64x1xf32>
    %30 = arith.mulf %26, %29 : vector<64x1xf32>
    %31 = vector.broadcast %30 : vector<64x1xf32> to vector<64x8xf32>
    %32 = arith.mulf %23, %31 : vector<64x8xf32>
    %c0_13 = arith.constant 0 : index
    %c0_14 = arith.constant 0 : index
    %33 = vector.load %arg4[%c0_13, %c0_14] : memref<64x8xf32, #tpu.memory_space<vmem>>, vector<64x8xf32>
    tpu.vector_store %arg4[%c0_13, %c0_14], %32 {strides = array<i32>} : memref<64x8xf32, #tpu.memory_space<vmem>>, vector<64x8xf32>,
    return
  }
  func.func @transform_0(%arg0: i32) -> (i32, i32) {
    %c0_i32 = arith.constant 0 : i32
    %c0_i32_0 = arith.constant 0 : i32
    return %arg0, %c0_i32 : i32, i32
  }
  func.func @transform_1(%arg0: i32) -> (i32, i32) {
    %c0_i32 = arith.constant 0 : i32
    %c0_i32_0 = arith.constant 0 : i32
    %c0_i32_1 = arith.constant 0 : i32
    return %c0_i32, %c0_i32_0 : i32, i32
  }
  func.func @transform_2(%arg0: i32) -> (i32, i32) {
    %c0_i32 = arith.constant 0 : i32
    %c0_i32_0 = arith.constant 0 : i32
    %c0_i32_1 = arith.constant 0 : i32
    return %c0_i32, %c0_i32_0 : i32, i32
  }
  func.func @transform_3(%arg0: i32) -> (i32, i32) {
    %c0_i32 = arith.constant 0 : i32
    %c0_i32_0 = arith.constant 0 : i32
    return %arg0, %c0_i32 : i32, i32
  }
}

</mosaic_0001>

<llo_original>
// kernel: tpu_custom_call.1
$region0: #{tpu_custom_call.1}
  #allocation0 [shape = 'u32[]', space=smem, size = 0x4, offset = 0x4, fixed_abs, tag = 'smem constant byte address 0x4 - core index']
  #allocation1 [shape = 'u32[72,128]{1,0:T(1,128)}', space=vmem, size = 0x9000, scoped, tag = 'internal scratch']
  %s0 = inlined_call_operand.vmem [shape: f32[128,32], index: 0, kind: input, shape index: {}]
  %s1 = inlined_call_operand.vmem [shape: f32[32,8], index: 1, kind: input, shape index: {}]
  %s2 = inlined_call_operand.vmem [shape: f32[1,8], index: 2, kind: input, shape index: {}]
  %s3 = inlined_call_operand.vmem [shape: f32[128,8], index: 3, kind: output, shape index: {}]
  %s4 = sld [smem:[#allocation0]]
  $region45: #{tpu_custom_call.1} parent=0
    _
  %s6 = ssub.s32 1, %s4
  %s7 = scalar_select 0, %s6, %s4
  loop: start=0, step=1, limit=4
  $region2: #{tpu_custom_call.1} parent=0 // loop_pre_header
    _
  $region3: #{tpu_custom_call.1} parent=0 // loop_header
    %s9 = sphi 0, %s13
    %p10 = scmp.ge.s32.totalorder %s9, 4
    %s19 = sphi 0, %s21
    %s22 = sphi 0, %s19
    %s23 = sphi 0, %s22
    %s39 = sphi 0, %s23
    %s43 = sphi 0, %s43
    %s45 = sphi 0, %s43
    %s46 = sphi 0, %s45
    %s60 = sphi 0, %s46
    %s64 = sphi 0, %s64
    %s66 = sphi 0, %s64
    %s67 = sphi 0, %s66
    %s81 = sphi 0, %s67
    %s87 = sphi 0, %s89
    %s90 = sphi 0, %s87
    %s91 = sphi 0, %s90
    %s107 = sphi 0, %s91
  $region4: #{tpu_custom_call.1} parent=0 // loop_header_branch
    %12 = sbr.rel (%p10) target = $region8
  $region5: #{tpu_custom_call.1} parent=0 // loop_body
    %s14 = ssub.s32 %s9, 1
    %s15 = ssub.s32 %s9, 2
    %s16 = sadd.s32 %s9, 1
    %s17 = ssub.s32 %s9, %s16
    %p18 = scmp.eq.s32.totalorder %s17, 0
    %s20 = sadd.s32 %s19, 1
    %s21 = scalar_select %p18, %s19, %s20
    %p24 = pneg %p18
    %p25 = scmp.eq.s32.totalorder %s9, 1
    %p26 = por %p24, %p25
    %p27 = scmp.ne.s32.totalorder %s19, %s22
    %p28 = scmp.eq.s32.totalorder %s9, 0
    %p29 = por %p27, %p28
    %p30 = scmp.ne.s32.totalorder %s19, %s22
    %p31 = scmp.eq.s32.totalorder %s14, 1
    %p32 = por %p30, %p31
    %p33 = scmp.ne.s32.totalorder %s22, %s23
    %p34 = scmp.eq.s32.totalorder %s14, 0
    %p35 = por %p33, %p34
    %p36 = scmp.ne.s32.totalorder %s22, %s23
    %p37 = scmp.eq.s32.totalorder %s15, 1
    %p38 = por %p36, %p37
    %p40 = scmp.ne.s32.totalorder %s23, %s39
    %p41 = scmp.eq.s32.totalorder %s15, 0
    %p42 = por %p40, %p41
    %s44 = sadd.s32 %s43, 1
    %p47 = scmp.eq.s32.totalorder %s9, 1
    %p48 = scmp.ne.s32.totalorder %s43, %s45
    %p49 = scmp.eq.s32.totalorder %s9, 0
    %p50 = por %p48, %p49
    %p51 = scmp.ne.s32.totalorder %s43, %s45
    %p52 = scmp.eq.s32.totalorder %s14, 1
    %p53 = por %p51, %p52
    %p54 = scmp.ne.s32.totalorder %s45, %s46
    %p55 = scmp.eq.s32.totalorder %s14, 0
    %p56 = por %p54, %p55
    %p57 = scmp.ne.s32.totalorder %s45, %s46
    %p58 = scmp.eq.s32.totalorder %s15, 1
    %p59 = por %p57, %p58
    %p61 = scmp.ne.s32.totalorder %s46, %s60
    %p62 = scmp.eq.s32.totalorder %s15, 0
    %p63 = por %p61, %p62
    %s65 = sadd.s32 %s64, 1
    %p68 = scmp.eq.s32.totalorder %s9, 1
    %p69 = scmp.ne.s32.totalorder %s64, %s66
    %p70 = scmp.eq.s32.totalorder %s9, 0
    %p71 = por %p69, %p70
    %p72 = scmp.ne.s32.totalorder %s64, %s66
    %p73 = scmp.eq.s32.totalorder %s14, 1
    %p74 = por %p72, %p73
    %p75 = scmp.ne.s32.totalorder %s66, %s67
    %p76 = scmp.eq.s32.totalorder %s14, 0
    %p77 = por %p75, %p76
    %p78 = scmp.ne.s32.totalorder %s66, %s67
    %p79 = scmp.eq.s32.totalorder %s15, 1
    %p80 = por %p78, %p79
    %p82 = scmp.ne.s32.totalorder %s67, %s81
    %p83 = scmp.eq.s32.totalorder %s15, 0
    %p84 = por %p82, %p83
    %s85 = ssub.s32 %s9, %s16
    %p86 = scmp.eq.s32.totalorder %s85, 0
    %s88 = sadd.s32 %s87, 1
    %s89 = scalar_select %p86, %s87, %s88
    %p92 = pneg %p86
    %p93 = scmp.eq.s32.totalorder %s9, 1
    %p94 = por %p92, %p93
    %p95 = scmp.ne.s32.totalorder %s87, %s90
    %p96 = scmp.eq.s32.totalorder %s9, 0
    %p97 = por %p95, %p96
    %p98 = scmp.ne.s32.totalorder %s87, %s90
    %p99 = scmp.eq.s32.totalorder %s14, 1
    %p100 = por %p98, %p99
    %p101 = scmp.ne.s32.totalorder %s90, %s91
    %p102 = scmp.eq.s32.totalorder %s14, 0
    %p103 = por %p101, %p102
    %p104 = scmp.ne.s32.totalorder %s90, %s91
    %p105 = scmp.eq.s32.totalorder %s15, 1
    %p106 = por %p104, %p105
    %p108 = scmp.ne.s32.totalorder %s91, %s107
    %p109 = scmp.eq.s32.totalorder %s15, 0
    %p110 = por %p108, %p109
    %p111 = scmp.le.s32.totalorder 1, %s9
    %p112 = scmp.lt.s32.totalorder %s9, 3
    %p113 = pnand %p111, %p112
    %p114 = pneg %p113
    // Predicated region
    $region9: #{tpu_custom_call.1} parent=5 // pred_check
      _
    $region10: #{tpu_custom_call.1} parent=5 // pred_check_branch
      %116 = sbr.rel (%p113) target = $region12
    $region11: #{tpu_custom_call.1} parent=5 // pred_region
      %s117 = ssub.s32 %s9, 1
      // Predicated region
      $region13: #{tpu_custom_call.1} parent=11 // pred_check
        %p118 = pneg %p56
      $region14: #{tpu_custom_call.1} parent=11 // pred_check_branch
        %120 = sbr.rel (%p118) target = $region16
      $region15: #{tpu_custom_call.1} parent=11 // pred_region
        _
      $region16: #{tpu_custom_call.1} parent=11 // pred_fallthru
        _
      // Predicated region
      $region17: #{tpu_custom_call.1} parent=11 // pred_check
        %p121 = pneg %p77
      $region18: #{tpu_custom_call.1} parent=11 // pred_check_branch
        %123 = sbr.rel (%p121) target = $region20
      $region19: #{tpu_custom_call.1} parent=11 // pred_region
        _
      $region20: #{tpu_custom_call.1} parent=11 // pred_fallthru
        _
    $region12: #{tpu_custom_call.1} parent=5 // pred_fallthru
      _
    %p124 = scmp.lt.s32.totalorder %s9, 2
    // Predicated region
    $region21: #{tpu_custom_call.1} parent=5 // pred_check
      %p125 = pneg %p124
    $region22: #{tpu_custom_call.1} parent=5 // pred_check_branch
      %127 = sbr.rel (%p125) target = $region24
    $region23: #{tpu_custom_call.1} parent=5 // pred_region
      // Predicated region
      $region25: #{tpu_custom_call.1} parent=23 // pred_check
        %p128 = pneg %p29
      $region26: #{tpu_custom_call.1} parent=23 // pred_check_branch
        %130 = sbr.rel (%p128) target = $region28
      $region27: #{tpu_custom_call.1} parent=23 // pred_region
        %s131 = smul.u32 8, %s9
        %p132 = scmp.lt.s32.totalorder %s131, 15
        %s133 = scalar_select %p132, %s131, 15
        %s134 = smul.addr %s133, 8
        %s135 = scalar_lea.vmem %s0, %s134
        %s136 = smul.u32 8, %s9
      $region28: #{tpu_custom_call.1} parent=23 // pred_fallthru
        _
    $region24: #{tpu_custom_call.1} parent=5 // pred_fallthru
      _
    %p137 = scmp.le.s32.totalorder 1, %s9
    %p138 = scmp.lt.s32.totalorder %s9, 3
    %p139 = pnand %p137, %p138
    %p140 = pneg %p139
    // Predicated region
    $region29: #{tpu_custom_call.1} parent=5 // pred_check
      _
    $region30: #{tpu_custom_call.1} parent=5 // pred_check_branch
      %142 = sbr.rel (%p139) target = $region32
    $region31: #{tpu_custom_call.1} parent=5 // pred_region
      %s143 = ssub.s32 %s9, 1
      %s144 = smul.u32 8, %s14
      %p145 = scmp.lt.s32.totalorder %s144, 15
      %s146 = scalar_select %p145, %s144, 15
      %s147 = smul.addr %s146, 8
      %s148 = scalar_lea.vmem %s0, %s147
      %p149 = pneg %p35
      %p150 = pneg %p32
      %p151 = pneg %p56
      %p152 = pneg %p53
      %p153 = pneg %p77
      %p154 = pneg %p74
      %p155 = pneg %p103
      %p156 = pneg %p100
      %s157 = smul.u32 8, %s14
      %p158 = scmp.lt.s32.totalorder %s157, 15
      %s159 = scalar_select %p158, %s157, 15
      %s160 = smul.addr %s159, 8
      %s161 = scalar_lea.vmem %s3, %s160
      %s162 = smul.u32 8, %s14
      %p163 = scmp.lt.s32.totalorder %s162, 15
      %s164 = scalar_select %p163, %s162, 15
      %s165 = smul.addr %s164, 8
      %s166 = scalar_lea.vmem %s0, %s165
      %s167 = smul.u32 8, %s14
      %s168 = smul.u32 8, %s14
      %p169 = scmp.lt.s32.totalorder %s168, 15
      %s170 = scalar_select %p169, %s168, 15
      %s171 = smul.addr %s170, 8
      %s172 = scalar_lea.vmem %s3, %s171
      %s173 = smul.u32 8, %s14
      %v174 = vld [vmem:[%s166] sm:$0xff]
      %v175 = vld [vmem:[%s166 + $0x8] sm:$0xff]
      %v176 = vld [vmem:[%s166 + $0x10] sm:$0xff]
      %v177 = vld [vmem:[%s166 + $0x18] sm:$0xff]
      %v178 = vld [vmem:[%s166 + $0x20] sm:$0xff]
      %v179 = vld [vmem:[%s166 + $0x28] sm:$0xff]
      %v180 = vld [vmem:[%s166 + $0x30] sm:$0xff]
      %v181 = vld [vmem:[%s166 + $0x38] sm:$0xff]
      %v182 = vld [vmem:[%s1] sm:$0xff]
      %v183 = vld [vmem:[%s1 + $0x8] sm:$0xff]
      %v184 = vld [vmem:[%s1 + $0x10] sm:$0xff]
      %v185 = vld [vmem:[%s1 + $0x18] sm:$0xff]
      %vm186 = vcmask 261120
      %v188 = vsel %vm186, %v174, 0
      %v191 = vsel %vm186, %v175, 0
      %v194 = vsel %vm186, %v176, 0
      %v197 = vsel %vm186, %v177, 0
      %v200 = vsel %vm186, %v178, 0
      %v203 = vsel %vm186, %v179, 0
      %v206 = vsel %vm186, %v180, 0
      %v209 = vsel %vm186, %v181, 0
      %211 = vmatpush.msra.mxu0 0.0
      %212 = vmatpush.msra.mxu0 0.0
      %213 = vmatpush.msra.mxu0 0.0
      %214 = vmatpush.msra.mxu0 0.0
      %215 = vmatpush.msra.mxu0 0.0
      %216 = vmatpush.msra.mxu0 0.0
      %217 = vmatpush.msra.mxu0 0.0
      %218 = vmatpush.msra.mxu0 0.0
      %219 = vmatpush.msra.mxu0 0.0
      %220 = vmatpush.msra.mxu0 0.0
      %221 = vmatpush.msra.mxu0 0.0
      %222 = vmatpush.msra.mxu0 0.0
      %223 = vmatpush.msra.mxu0 %v185
      %224 = vmatpush.msra.mxu0 %v184
      %225 = vmatpush.msra.mxu0 %v183
      %226 = vmatpush.msra.mxu0 %v182
      %227 = vmatmul.f32.gmra.mxu0 %v188
      %v228 = vpop.f32.mrf.mxu0
      %v229 = vadd.f32 0.0, %v228
      %230 = vmatmul.f32.gmra.mxu0 %v191
      %v231 = vpop.f32.mrf.mxu0
      %v232 = vadd.f32 0.0, %v231
      %233 = vmatmul.f32.gmra.mxu0 %v194
      %v234 = vpop.f32.mrf.mxu0
      %v235 = vadd.f32 0.0, %v234
      %236 = vmatmul.f32.gmra.mxu0 %v197
      %v237 = vpop.f32.mrf.mxu0
      %v238 = vadd.f32 0.0, %v237
      %239 = vmatmul.f32.gmra.mxu0 %v200
      %v240 = vpop.f32.mrf.mxu0
      %v241 = vadd.f32 0.0, %v240
      %242 = vmatmul.f32.gmra.mxu0 %v203
      %v243 = vpop.f32.mrf.mxu0
      %v244 = vadd.f32 0.0, %v243
      %245 = vmatmul.f32.gmra.mxu0 %v206
      %v246 = vpop.f32.mrf.mxu0
      %v247 = vadd.f32 0.0, %v246
      %248 = vmatmul.f32.gmra.mxu0 %v209
      %v249 = vpop.f32.mrf.mxu0
      %v250 = vadd.f32 0.0, %v249
      %251 = vdwg.mxu0
      %v252 = vmul.f32 %v174, %v174
      %v253 = vmul.f32 %v175, %v175
      %v254 = vmul.f32 %v176, %v176
      %v255 = vmul.f32 %v177, %v177
      %v256 = vmul.f32 %v178, %v178
      %v257 = vmul.f32 %v179, %v179
      %v258 = vmul.f32 %v180, %v180
      %v259 = vmul.f32 %v181, %v181
      %v260 = vsel %vm186, %v252, 0.0
      %261 = vadd.xlane.f32.xlu0 %v260
      %v262 = vpop.xlane.xlu0 %261
      %v263 = vsel %vm186, %v253, 0.0
      %264 = vadd.xlane.f32.xlu0 %v263
      %v265 = vpop.xlane.xlu0 %264
      %v266 = vsel %vm186, %v254, 0.0
      %267 = vadd.xlane.f32.xlu0 %v266
      %v268 = vpop.xlane.xlu0 %267
      %v269 = vsel %vm186, %v255, 0.0
      %270 = vadd.xlane.f32.xlu0 %v269
      %v271 = vpop.xlane.xlu0 %270
      %v272 = vsel %vm186, %v256, 0.0
      %273 = vadd.xlane.f32.xlu0 %v272
      %v274 = vpop.xlane.xlu0 %273
      %v275 = vsel %vm186, %v257, 0.0
      %276 = vadd.xlane.f32.xlu0 %v275
      %v277 = vpop.xlane.xlu0 %276
      %v278 = vsel %vm186, %v258, 0.0
      %279 = vadd.xlane.f32.xlu0 %v278
      %v280 = vpop.xlane.xlu0 %279
      %v281 = vsel %vm186, %v259, 0.0
      %282 = vadd.xlane.f32.xlu0 %v281
      %v283 = vpop.xlane.xlu0 %282
      %v284 = vld [vmem:[%s2] sm:$0x1]
      %v286 = vperm.slane %v284, 0
      %v288 = vadd.f32 %v262, %v286
      %v289 = vadd.f32 %v265, %v286
      %v290 = vadd.f32 %v268, %v286
      %v291 = vadd.f32 %v271, %v286
      %v292 = vadd.f32 %v274, %v286
      %v293 = vadd.f32 %v277, %v286
      %v294 = vadd.f32 %v280, %v286
      %v295 = vadd.f32 %v283, %v286
      %v296 = vmul.f32 %v229, 2.0
      %v297 = vmul.f32 %v232, 2.0
      %v298 = vmul.f32 %v235, 2.0
      %v299 = vmul.f32 %v238, 2.0
      %v300 = vmul.f32 %v241, 2.0
      %v301 = vmul.f32 %v244, 2.0
      %v302 = vmul.f32 %v247, 2.0
      %v303 = vmul.f32 %v250, 2.0
      %v304 = vsub.f32 %v288, %v296
      %v305 = vsub.f32 %v289, %v297
      %v306 = vsub.f32 %v290, %v298
      %v307 = vsub.f32 %v291, %v299
      %v308 = vsub.f32 %v292, %v300
      %v309 = vsub.f32 %v293, %v301
      %v310 = vsub.f32 %v294, %v302
      %v311 = vsub.f32 %v295, %v303
      %v312 = vmax.f32 %v304, 0.0
      %v313 = vmax.f32 %v305, 0.0
      %v314 = vmax.f32 %v306, 0.0
      %v315 = vmax.f32 %v307, 0.0
      %v316 = vmax.f32 %v308, 0.0
      %v317 = vmax.f32 %v309, 0.0
      %v318 = vmax.f32 %v310, 0.0
      %v319 = vmax.f32 %v311, 0.0
      %v320 = vadd.f32 %v312, 1.0
      %v321 = vadd.f32 %v313, 1.0
      %v322 = vadd.f32 %v314, 1.0
      %v323 = vadd.f32 %v315, 1.0
      %v324 = vadd.f32 %v316, 1.0
      %v325 = vadd.f32 %v317, 1.0
      %v326 = vadd.f32 %v318, 1.0
      %v327 = vadd.f32 %v319, 1.0
      %v328 = vrcp.pop %v320
      %v329 = vrcp.pop %v321
      %v330 = vrcp.pop %v322
      %v331 = vrcp.pop %v323
      %v332 = vrcp.pop %v324
      %v333 = vrcp.pop %v325
      %v334 = vrcp.pop %v326
      %v335 = vrcp.pop %v327
      %v336 = vmul.f32 %v320, %v328
      %v337 = vmul.f32 %v321, %v329
      %v338 = vmul.f32 %v322, %v330
      %v339 = vmul.f32 %v323, %v331
      %v340 = vmul.f32 %v324, %v332
      %v341 = vmul.f32 %v325, %v333
      %v342 = vmul.f32 %v326, %v334
      %v343 = vmul.f32 %v327, %v335
      %v344 = vsub.f32 2.0, %v336
      %v345 = vsub.f32 2.0, %v337
      %v346 = vsub.f32 2.0, %v338
      %v347 = vsub.f32 2.0, %v339
      %v348 = vsub.f32 2.0, %v340
      %v349 = vsub.f32 2.0, %v341
      %v350 = vsub.f32 2.0, %v342
      %v351 = vsub.f32 2.0, %v343
      %v352 = vmul.f32 %v328, %v344
      %v353 = vmul.f32 %v329, %v345
      %v354 = vmul.f32 %v330, %v346
      %v355 = vmul.f32 %v331, %v347
      %v356 = vmul.f32 %v332, %v348
      %v357 = vmul.f32 %v333, %v349
      %v358 = vmul.f32 %v334, %v350
      %v359 = vmul.f32 %v335, %v351
      %vm360 = vcmask 64512
      %v361 = vsel %vm360, %v352, 0.0
      %362 = vadd.xlane.f32.xlu0 %v361
      %v363 = vpop.xlane.xlu0 %362
      %v364 = vsel %vm360, %v353, 0.0
      %365 = vadd.xlane.f32.xlu0 %v364
      %v366 = vpop.xlane.xlu0 %365
      %v367 = vsel %vm360, %v354, 0.0
      %368 = vadd.xlane.f32.xlu0 %v367
      %v369 = vpop.xlane.xlu0 %368
      %v370 = vsel %vm360, %v355, 0.0
      %371 = vadd.xlane.f32.xlu0 %v370
      %v372 = vpop.xlane.xlu0 %371
      %v373 = vsel %vm360, %v356, 0.0
      %374 = vadd.xlane.f32.xlu0 %v373
      %v375 = vpop.xlane.xlu0 %374
      %v376 = vsel %vm360, %v357, 0.0
      %377 = vadd.xlane.f32.xlu0 %v376
      %v378 = vpop.xlane.xlu0 %377
      %v379 = vsel %vm360, %v358, 0.0
      %380 = vadd.xlane.f32.xlu0 %v379
      %v381 = vpop.xlane.xlu0 %380
      %v382 = vsel %vm360, %v359, 0.0
      %383 = vadd.xlane.f32.xlu0 %v382
      %v384 = vpop.xlane.xlu0 %383
      %v385 = vrcp.pop %v363
      %v386 = vrcp.pop %v366
      %v387 = vrcp.pop %v369
      %v388 = vrcp.pop %v372
      %v389 = vrcp.pop %v375
      %v390 = vrcp.pop %v378
      %v391 = vrcp.pop %v381
      %v392 = vrcp.pop %v384
      %v393 = vmul.f32 %v363, %v385
      %v394 = vmul.f32 %v366, %v386
      %v395 = vmul.f32 %v369, %v387
      %v396 = vmul.f32 %v372, %v388
      %v397 = vmul.f32 %v375, %v389
      %v398 = vmul.f32 %v378, %v390
      %v399 = vmul.f32 %v381, %v391
      %v400 = vmul.f32 %v384, %v392
      %v401 = vsub.f32 2.0, %v393
      %v402 = vsub.f32 2.0, %v394
      %v403 = vsub.f32 2.0, %v395
      %v404 = vsub.f32 2.0, %v396
      %v405 = vsub.f32 2.0, %v397
      %v406 = vsub.f32 2.0, %v398
      %v407 = vsub.f32 2.0, %v399
      %v408 = vsub.f32 2.0, %v400
      %v409 = vmul.f32 %v385, %v401
      %v410 = vmul.f32 %v386, %v402
      %v411 = vmul.f32 %v387, %v403
      %v412 = vmul.f32 %v388, %v404
      %v413 = vmul.f32 %v389, %v405
      %v414 = vmul.f32 %v390, %v406
      %v415 = vmul.f32 %v391, %v407
      %v416 = vmul.f32 %v392, %v408
      %v417 = vmul.f32 %v352, %v409
      %v418 = vmul.f32 %v353, %v410
      %v419 = vmul.f32 %v354, %v411
      %v420 = vmul.f32 %v355, %v412
      %v421 = vmul.f32 %v356, %v413
      %v422 = vmul.f32 %v357, %v414
      %v423 = vmul.f32 %v358, %v415
      %v424 = vmul.f32 %v359, %v416
      %425 = vst.msk [vmem:[%s172] sm:$0xff] %vm360, %v417
      %426 = vst.msk [vmem:[%s172 + $0x8] sm:$0xff] %vm360, %v418
      %427 = vst.msk [vmem:[%s172 + $0x10] sm:$0xff] %vm360, %v419
      %428 = vst.msk [vmem:[%s172 + $0x18] sm:$0xff] %vm360, %v420
      %429 = vst.msk [vmem:[%s172 + $0x20] sm:$0xff] %vm360, %v421
      %430 = vst.msk [vmem:[%s172 + $0x28] sm:$0xff] %vm360, %v422
      %431 = vst.msk [vmem:[%s172 + $0x30] sm:$0xff] %vm360, %v423
      %432 = vst.msk [vmem:[%s172 + $0x38] sm:$0xff] %vm360, %v424
      %s433 = smul.u32 8, %s14
      %p434 = scmp.lt.s32.totalorder %s433, 15
      %s435 = scalar_select %p434, %s433, 15
      %s436 = smul.addr %s435, 8
      %s437 = scalar_lea.vmem %s3, %s436
      // Predicated region
      $region33: #{tpu_custom_call.1} parent=31 // pred_check
        %p438 = pneg %p100
      $region34: #{tpu_custom_call.1} parent=31 // pred_check_branch
        %440 = sbr.rel (%p438) target = $region36
      $region35: #{tpu_custom_call.1} parent=31 // pred_region
        %s441 = smul.u32 8, %s14
      $region36: #{tpu_custom_call.1} parent=31 // pred_fallthru
        _
    $region32: #{tpu_custom_call.1} parent=5 // pred_fallthru
      _
    %p442 = scmp.le.s32.totalorder 2, %s9
    // Predicated region
    $region37: #{tpu_custom_call.1} parent=5 // pred_check
      %p443 = pneg %p442
    $region38: #{tpu_custom_call.1} parent=5 // pred_check_branch
      %445 = sbr.rel (%p443) target = $region40
    $region39: #{tpu_custom_call.1} parent=5 // pred_region
      %s446 = ssub.s32 %s9, 2
      // Predicated region
      $region41: #{tpu_custom_call.1} parent=39 // pred_check
        %p447 = pneg %p106
      $region42: #{tpu_custom_call.1} parent=39 // pred_check_branch
        %449 = sbr.rel (%p447) target = $region44
      $region43: #{tpu_custom_call.1} parent=39 // pred_region
        %s450 = smul.u32 8, %s15
        %p451 = scmp.lt.s32.totalorder %s450, 15
        %s452 = scalar_select %p451, %s450, 15
        %s453 = smul.addr %s452, 8
        %s454 = scalar_lea.vmem %s3, %s453
      $region44: #{tpu_custom_call.1} parent=39 // pred_fallthru
        _
    $region40: #{tpu_custom_call.1} parent=5 // pred_fallthru
      _
  $region6: #{tpu_custom_call.1} parent=0 // loop_footer
    %s13 = sadd.s32 1, %s9
  $region7: #{tpu_custom_call.1} parent=0 // loop_footer_branch
    %8 = sbr.rel target = $region3
  $region8: #{tpu_custom_call.1} parent=0 // loop_exit
    _

</llo_original>
